<compile_context>
chip_gen: v7x
topology: tpu7x:2x2x1
jax: 0.10.0
libtpu: 0.0.40
codegen_flags: <defaults>
</compile_context>

<pallas_src>
import math

import jax
import jax.numpy as jnp
from jax.experimental import pallas as pl
from jax.experimental.pallas import tpu as pltpu


# ----------------------------------------------------------------------------
# Pallas kernels
# ----------------------------------------------------------------------------

def _rope_fused_kernel(cos_ref, sin_ref, q_ref, k_ref, oq_ref, ok_ref):
    """out = x*cos + roll(x, D/2)*sin_signed, applied to q and k in one body."""
    cos = cos_ref[...]                      # (S_t, D), broadcasts over heads
    sin = sin_ref[...]                      # (S_t, D), sign-folded
    half = q_ref.shape[-1] // 2
    q = q_ref[...]                          # (Hb, S_t, D)
    k = k_ref[...]
    oq_ref[...] = (q * cos + pltpu.roll(q, shift=half, axis=2) * sin).astype(oq_ref.dtype)
    ok_ref[...] = (k * cos + pltpu.roll(k, shift=half, axis=2) * sin).astype(ok_ref.dtype)


def _rope_single_kernel(cos_ref, sin_ref, x_ref, o_ref):
    cos = cos_ref[...]
    sin = sin_ref[...]
    half = x_ref.shape[-1] // 2
    x = x_ref[...]
    o_ref[...] = (x * cos + pltpu.roll(x, shift=half, axis=2) * sin).astype(o_ref.dtype)


# ----------------------------------------------------------------------------
# Tiling / wrappers
# ----------------------------------------------------------------------------

def _choose_tiles(num_bh, seq, head_dim, itemsize, target_bytes=1 << 20):
    """Pick (heads_per_block, seq_tile): block <= ~target_bytes,
    heads_per_block divides num_bh, seq_tile divides seq and is a multiple of
    8 (sublane) unless it equals the full seq.  Keeps double-buffered VMEM use
    well under the scoped default (including v7x's 64 MiB physical VMEM)."""
    hb = 1
    for cand in range(1, num_bh + 1):
        if num_bh % cand == 0 and cand * seq * head_dim * itemsize <= target_bytes:
            hb = cand
    s_tile = seq
    if hb == 1 and seq * head_dim * itemsize > target_bytes:
        best = None
        for cand in range(8, seq, 8):
            if seq % cand == 0 and cand * head_dim * itemsize <= target_bytes:
                best = cand
        if best is not None:
            s_tile = best
    return hb, s_tile


def rope_fused_pallas(query, key, cos, sin_signed):
    """Apply RoPE to query and key ([B, H, S, D]) with a single pallas_call.

    cos / sin_signed: [S, D] tables (sin already sign-folded for the roll).
    """
    # TODO(synk): for head_dim < 128 a lane-dense packing (two heads per lane
    # row) would need an HBM-side transpose upstream; not done here.
    B, H, S, D = query.shape
    BH = B * H
    qf = query.reshape(BH, S, D)
    kf = key.reshape(BH, S, D)
    hb, s_tile = _choose_tiles(BH, S, D, query.dtype.itemsize)
    # Seq tiles OUTER so the table block index is constant over the inner head
    # loop -> Pallas skips redundant table DMAs.
    grid = (S // s_tile, BH // hb)
    x_spec = pl.BlockSpec((hb, s_tile, D), lambda s, h: (h, s, 0))
    t_spec = pl.BlockSpec((s_tile, D), lambda s, h: (s, 0))
    q_rot, k_rot = pl.pallas_call(
        _rope_fused_kernel,
        out_shape=(jax.ShapeDtypeStruct((BH, S, D), query.dtype),
                   jax.ShapeDtypeStruct((BH, S, D), key.dtype)),
        grid_spec=pltpu.PrefetchScalarGridSpec(
            num_scalar_prefetch=0,
            grid=grid,
            in_specs=[t_spec, t_spec, x_spec, x_spec],
            out_specs=[x_spec, x_spec],
        ),
        compiler_params=pltpu.CompilerParams(
            dimension_semantics=("parallel", "parallel")),
    )(cos, sin_signed, qf, kf)
    return q_rot.reshape(B, H, S, D), k_rot.reshape(B, H, S, D)


def rope_single_pallas(x, cos, sin_signed):
    """Apply RoPE to one [B, H, S, D] tensor (used when Sq != Sk)."""
    B, H, S, D = x.shape
    BH = B * H
    xf = x.reshape(BH, S, D)
    hb, s_tile = _choose_tiles(BH, S, D, x.dtype.itemsize)
    grid = (S // s_tile, BH // hb)
    x_spec = pl.BlockSpec((hb, s_tile, D), lambda s, h: (h, s, 0))
    t_spec = pl.BlockSpec((s_tile, D), lambda s, h: (s, 0))
    out = pl.pallas_call(
        _rope_single_kernel,
        out_shape=jax.ShapeDtypeStruct((BH, S, D), x.dtype),
        grid_spec=pltpu.PrefetchScalarGridSpec(
            num_scalar_prefetch=0,
            grid=grid,
            in_specs=[t_spec, t_spec, x_spec],
            out_specs=x_spec,
        ),
        compiler_params=pltpu.CompilerParams(
            dimension_semantics=("parallel", "parallel")),
    )(cos, sin_signed, xf)
    return out.reshape(B, H, S, D)


# ----------------------------------------------------------------------------
# Modules (JAX ports of the PyTorch classes)
# ----------------------------------------------------------------------------

class RotaryPositionEmbedding:
    """JAX/Pallas port of the PyTorch RotaryPositionEmbedding module."""

    def __init__(self, dim: int, max_position_embeddings: int = 2048):
        self.dim = dim
        self.max_position_embeddings = max_position_embeddings
        # inv_freq = 1 / 10000^(arange(0, dim, 2)/dim)
        self.inv_freq = 1.0 / (
            10000.0 ** (jnp.arange(0, dim, 2, dtype=jnp.float32) / dim)
        )

    def _get_rotary_embeddings(self, position_ids):
        # sinusoidal: [S, dim/2]
        sinusoidal = position_ids.astype(jnp.float32)[:, None] * self.inv_freq[None, :]
        sin_h, cos_h = jnp.sin(sinusoidal), jnp.cos(sinusoidal)
        sin = jnp.concatenate([sin_h, sin_h], axis=-1)
        cos = jnp.concatenate([cos_h, cos_h], axis=-1)
        return cos, sin  # each [S, dim]

    def _get_tables(self, position_ids, dtype):
        """cos and sign-folded sin, cast to the activation dtype.

        rotate_half(x)*sin == roll(x, D/2, axis=-1) * concat([-sin_h, sin_h]).
        """
        sinusoidal = position_ids.astype(jnp.float32)[:, None] * self.inv_freq[None, :]
        sin_h, cos_h = jnp.sin(sinusoidal), jnp.cos(sinusoidal)
        cos = jnp.concatenate([cos_h, cos_h], axis=-1).astype(dtype)
        sin_signed = jnp.concatenate([-sin_h, sin_h], axis=-1).astype(dtype)
        return cos, sin_signed

    def __call__(self, query, key, position_ids):
        # query: [B, H, Sq, D], key: [B, H, Sk, D], position_ids: [Sq]
        cos, sin_signed = self._get_tables(position_ids, query.dtype)
        sk = key.shape[2]
        if sk == query.shape[2]:
            # Common (no-cache) case: one fused kernel for q and k.
            return rope_fused_pallas(query, key, cos, sin_signed)
        # Fallback (kv-cache decode): slice the shared tables for the key
        # length instead of recomputing the trig (requires
        # sk <= len(position_ids), as in the reference module).
        q_rot = rope_single_pallas(query, cos, sin_signed)
        k_rot = rope_single_pallas(key, cos[:sk], sin_signed[:sk])
        return q_rot, k_rot


class RotaryAttention:
    """JAX port of the PyTorch RotaryAttention forward (eval mode).

    RoPE runs as the Pallas TPU kernel above; the dense projections and the
    softmax-attention core are left to XLA.
    """
    # TODO(synk): QK^T / softmax / PV core is plain XLA (could become a fused
    # flash-attention Pallas kernel); dropout omitted (inference / eval mode).

    def __init__(self, hidden_size, num_heads, rotary_dim, dropout_prob=0.1,
                 max_position_embeddings=2048, *, param_key=None, dtype=jnp.float32):
        if hidden_size % num_heads != 0:
            raise ValueError(
                f"hidden_size {hidden_size} must be divisible by num_heads {num_heads}")
        self.hidden_size = hidden_size
        self.num_heads = num_heads
        self.head_dim = hidden_size // num_heads
        self.rotary_dim = min(rotary_dim, self.head_dim)
        self.scale = 1.0 / math.sqrt(self.head_dim)
        self.rotary_emb = RotaryPositionEmbedding(
            dim=self.rotary_dim, max_position_embeddings=max_position_embeddings)

        if param_key is None:
            param_key = jax.random.PRNGKey(0)
        ks = jax.random.split(param_key, 8)
        bound = 1.0 / math.sqrt(hidden_size)

        def _linear(kw, kb):
            w = jax.random.uniform(kw, (hidden_size, hidden_size), dtype, -bound, bound)
            b = jax.random.uniform(kb, (hidden_size,), dtype, -bound, bound)
            return w, b

        self.q_w, self.q_b = _linear(ks[0], ks[1])
        self.k_w, self.k_b = _linear(ks[2], ks[3])
        self.v_w, self.v_b = _linear(ks[4], ks[5])
        self.o_w, self.o_b = _linear(ks[6], ks[7])

    def _split_heads(self, t):
        b, s, _ = t.shape
        return t.reshape(b, s, self.num_heads, self.head_dim).transpose(0, 2, 1, 3)

    def _merge_heads(self, t):
        b, _, s, _ = t.shape
        return t.transpose(0, 2, 1, 3).reshape(b, s, self.hidden_size)

    def __call__(self, hidden_states, attention_mask=None, position_ids=None,
                 past_key_values=None, use_cache=False, output_attentions=False):
        b, s, _ = hidden_states.shape
        if position_ids is None:
            position_ids = jnp.arange(s, dtype=jnp.int32)

        query = hidden_states @ self.q_w.T + self.q_b
        key = hidden_states @ self.k_w.T + self.k_b
        value = hidden_states @ self.v_w.T + self.v_b

        if past_key_values is not None:
            past_key, past_value = past_key_values
            key = jnp.concatenate([past_key, key], axis=1)
            value = jnp.concatenate([past_value, value], axis=1)
        current_key_value = (key, value) if use_cache else None

        query = self._split_heads(query)
        key = self._split_heads(key)
        value = self._split_heads(value)

        query, key = self.rotary_emb(query, key, position_ids)

        scores = jnp.einsum("bhqd,bhkd->bhqk", query, key) * self.scale
        if attention_mask is not None:
            scores = scores + attention_mask
        weights = jax.nn.softmax(scores, axis=-1)
        context = jnp.einsum("bhqk,bhkd->bhqd", weights, value)
        context = self._merge_heads(context)
        output = context @ self.o_w.T + self.o_b

        outputs = (output, current_key_value)
        if output_attentions:
            outputs += (weights,)
        return outputs


# ----------------------------------------------------------------------------
# Reference + demo
# ----------------------------------------------------------------------------

def _rope_reference(x, cos, sin):
    """Pure-JAX reference (mirrors the PyTorch rotate_half formulation)."""
    d = x.shape[-1]
    x1, x2 = x[..., : d // 2], x[..., d // 2:]
    rot = jnp.concatenate([-x2, x1], axis=-1)
    return x * cos[None, None] + rot * sin[None, None]


if __name__ == "__main__":
    # Small but lane-dense shapes: head_dim = 128 (multiple of 128).
    B, H, S, D = 2, 4, 8, 128
    hidden = H * D  # 512

    root = jax.random.PRNGKey(0)
    k_attn, k_x, kq, kk = jax.random.split(root, 4)

    # --- direct correctness check of the fused RoPE Pallas kernel ---
    query = jax.random.normal(kq, (B, H, S, D), dtype=jnp.float32)
    key = jax.random.normal(kk, (B, H, S, D), dtype=jnp.float32)
    position_ids = jnp.arange(S, dtype=jnp.int32)

    rope = RotaryPositionEmbedding(dim=D, max_position_embeddings=2048)
    q_rot, k_rot = rope(query, key, position_ids)
    q_rot = jax.block_until_ready(q_rot)
    k_rot = jax.block_until_ready(k_rot)

    cos_ref, sin_ref = rope._get_rotary_embeddings(position_ids)
    q_expect = _rope_reference(query, cos_ref, sin_ref)
    k_expect = _rope_reference(key, cos_ref, sin_ref)
    assert jnp.allclose(q_rot, q_expect, atol=1e-5, rtol=1e-5)
    assert jnp.allclose(k_rot, k_expect, atol=1e-5, rtol=1e-5)

    # --- full RotaryAttention forward (RoPE via Pallas, rest XLA) ---
    attn = RotaryAttention(hidden_size=hidden, num_heads=H, rotary_dim=D,
                           param_key=k_attn)
    hidden_states = jax.random.normal(k_x, (B, S, hidden), dtype=jnp.float32)
    output, _ = attn(hidden_states)
    output = jax.block_until_ready(output)
    assert output.shape == (B, S, hidden)
    assert bool(jnp.all(jnp.isfinite(output)))

    print("KERNEL_OK")
</pallas_src>

<mosaic_0001>
module attributes {stable_mosaic.version = 11 : i64} {
  func.func @_rope_fused_kernel(%arg0: i32, %arg1: i32, %arg2: memref<8x128xf32, #tpu.memory_space<vmem>>, %arg3: memref<8x128xf32, #tpu.memory_space<vmem>>, %arg4: memref<8x8x128xf32, #tpu.memory_space<vmem>>, %arg5: memref<8x8x128xf32, #tpu.memory_space<vmem>>, %arg6: memref<8x8x128xf32, #tpu.memory_space<vmem>>, %arg7: memref<8x8x128xf32, #tpu.memory_space<vmem>>) attributes {dimension_semantics = [#tpu.dimension_semantics<parallel>, #tpu.dimension_semantics<parallel>], iteration_bounds = array<i64: 1, 1>, scalar_prefetch = 0 : i64, scratch_operands = 0 : i64, tpu.core_type = #tpu.core_type<tc>, window_params = [{transform_indices = @transform_0, window_bounds = array<i64: 8, 128>}, {transform_indices = @transform_1, window_bounds = array<i64: 8, 128>}, {transform_indices = @transform_2, window_bounds = array<i64: 8, 8, 128>}, {transform_indices = @transform_3, window_bounds = array<i64: 8, 8, 128>}, {transform_indices = @transform_4, window_bounds = array<i64: 8, 8, 128>}, {transform_indices = @transform_5, window_bounds = array<i64: 8, 8, 128>}]} {
    %c0 = arith.constant 0 : index
    %c0_0 = arith.constant 0 : index
    %0 = vector.load %arg2[%c0, %c0_0] : memref<8x128xf32, #tpu.memory_space<vmem>>, vector<8x128xf32>
    %c0_1 = arith.constant 0 : index
    %c0_2 = arith.constant 0 : index
    %1 = vector.load %arg3[%c0_1, %c0_2] : memref<8x128xf32, #tpu.memory_space<vmem>>, vector<8x128xf32>
    %c0_3 = arith.constant 0 : index
    %c0_4 = arith.constant 0 : index
    %c0_5 = arith.constant 0 : index
    %2 = vector.load %arg4[%c0_3, %c0_4, %c0_5] : memref<8x8x128xf32, #tpu.memory_space<vmem>>, vector<8x8x128xf32>
    %c0_6 = arith.constant 0 : index
    %c0_7 = arith.constant 0 : index
    %c0_8 = arith.constant 0 : index
    %3 = vector.load %arg5[%c0_6, %c0_7, %c0_8] : memref<8x8x128xf32, #tpu.memory_space<vmem>>, vector<8x8x128xf32>
    %4 = vector.shape_cast %0 : vector<8x128xf32> to vector<1x8x128xf32>
    %5 = vector.broadcast %4 : vector<1x8x128xf32> to vector<8x8x128xf32>
    %6 = arith.mulf %2, %5 : vector<8x8x128xf32>
    %c64_i32 = arith.constant 64 : i32
    %7 = tpu.dynamic_rotate %2 by %c64_i32 dim 2 : vector<8x8x128xf32>, i32 -> vector<8x8x128xf32>
    %8 = vector.shape_cast %1 : vector<8x128xf32> to vector<1x8x128xf32>
    %9 = vector.broadcast %8 : vector<1x8x128xf32> to vector<8x8x128xf32>
    %10 = arith.mulf %7, %9 : vector<8x8x128xf32>
    %11 = arith.addf %6, %10 : vector<8x8x128xf32>
    %c0_9 = arith.constant 0 : index
    %c0_10 = arith.constant 0 : index
    %c0_11 = arith.constant 0 : index
    %12 = vector.load %arg6[%c0_9, %c0_10, %c0_11] : memref<8x8x128xf32, #tpu.memory_space<vmem>>, vector<8x8x128xf32>
    tpu.vector_store %arg6[%c0_9, %c0_10, %c0_11], %11 {strides = array<i32>} : memref<8x8x128xf32, #tpu.memory_space<vmem>>, vector<8x8x128xf32>,
    %13 = vector.shape_cast %0 : vector<8x128xf32> to vector<1x8x128xf32>
    %14 = vector.broadcast %13 : vector<1x8x128xf32> to vector<8x8x128xf32>
    %15 = arith.mulf %3, %14 : vector<8x8x128xf32>
    %c64_i32_12 = arith.constant 64 : i32
    %16 = tpu.dynamic_rotate %3 by %c64_i32_12 dim 2 : vector<8x8x128xf32>, i32 -> vector<8x8x128xf32>
    %17 = vector.shape_cast %1 : vector<8x128xf32> to vector<1x8x128xf32>
    %18 = vector.broadcast %17 : vector<1x8x128xf32> to vector<8x8x128xf32>
    %19 = arith.mulf %16, %18 : vector<8x8x128xf32>
    %20 = arith.addf %15, %19 : vector<8x8x128xf32>
    %c0_13 = arith.constant 0 : index
    %c0_14 = arith.constant 0 : index
    %c0_15 = arith.constant 0 : index
    %21 = vector.load %arg7[%c0_13, %c0_14, %c0_15] : memref<8x8x128xf32, #tpu.memory_space<vmem>>, vector<8x8x128xf32>
    tpu.vector_store %arg7[%c0_13, %c0_14, %c0_15], %20 {strides = array<i32>} : memref<8x8x128xf32, #tpu.memory_space<vmem>>, vector<8x8x128xf32>,
    return
  }
  func.func @transform_0(%arg0: i32, %arg1: i32) -> (i32, i32) {
    %c0_i32 = arith.constant 0 : i32
    %c0_i32_0 = arith.constant 0 : i32
    return %arg0, %c0_i32 : i32, i32
  }
  func.func @transform_1(%arg0: i32, %arg1: i32) -> (i32, i32) {
    %c0_i32 = arith.constant 0 : i32
    %c0_i32_0 = arith.constant 0 : i32
    return %arg0, %c0_i32 : i32, i32
  }
  func.func @transform_2(%arg0: i32, %arg1: i32) -> (i32, i32, i32) {
    %c0_i32 = arith.constant 0 : i32
    %c0_i32_0 = arith.constant 0 : i32
    return %arg1, %arg0, %c0_i32 : i32, i32, i32
  }
  func.func @transform_3(%arg0: i32, %arg1: i32) -> (i32, i32, i32) {
    %c0_i32 = arith.constant 0 : i32
    %c0_i32_0 = arith.constant 0 : i32
    return %arg1, %arg0, %c0_i32 : i32, i32, i32
  }
  func.func @transform_4(%arg0: i32, %arg1: i32) -> (i32, i32, i32) {
    %c0_i32 = arith.constant 0 : i32
    %c0_i32_0 = arith.constant 0 : i32
    return %arg1, %arg0, %c0_i32 : i32, i32, i32
  }
  func.func @transform_5(%arg0: i32, %arg1: i32) -> (i32, i32, i32) {
    %c0_i32 = arith.constant 0 : i32
    %c0_i32_0 = arith.constant 0 : i32
    return %arg1, %arg0, %c0_i32 : i32, i32, i32
  }
}

</mosaic_0001>

<llo_original>
// kernel: tpu_custom_call.1
$region0: #{tpu_custom_call.1}
  #allocation0 [shape = 'u32[]', space=smem, size = 0x4, offset = 0x4, fixed_abs, tag = 'smem constant byte address 0x4 - core index']
  #allocation1 [shape = 'u32[144,128]{1,0:T(1,128)}', space=vmem, size = 0x12000, scoped, tag = 'internal scratch']
  %s0 = inlined_call_operand.hbm [shape: f32[8,128], index: 0, kind: input, shape index: {}]
  %s1 = inlined_call_operand.hbm [shape: f32[8,128], index: 1, kind: input, shape index: {}]
  %s2 = inlined_call_operand.hbm [shape: f32[8,8,128], index: 2, kind: input, shape index: {}]
  %s3 = inlined_call_operand.hbm [shape: f32[8,8,128], index: 3, kind: input, shape index: {}]
  %s4 = inlined_call_operand.hbm [shape: f32[8,8,128], index: 4, kind: output, shape index: {0}]
  %s5 = inlined_call_operand.hbm [shape: f32[8,8,128], index: 5, kind: output, shape index: {1}]
  %6 = xla_tuple %s4, %s5
  %s7 = sld [smem:[#allocation0]]
  $region50: #{tpu_custom_call.1} parent=0
    _
  %s9 = ssub.s32 1, %s7
  %s10 = scalar_select 0, %s9, %s7
  $region1: #{tpu_custom_call.1} parent=0
    #allocation2 [shape = 'u8[4096]{0}', space=vmem, size = 0x1000, scoped, tag = 'input window, operand 0, single buffered']
    #allocation3 [shape = 's32[1]{0}', space=sflag, size = 0x4, scoped, tag = 'scoped memory for tpu_custom_call.1']
    #allocation4 [shape = 's32[1]{0}', space=sflag, size = 0x4, scoped, tag = 'scoped memory for tpu_custom_call.1']
    #allocation5 [shape = 'u8[4096]{0}', space=vmem, size = 0x1000, scoped, tag = 'input window, operand 1, single buffered']
    #allocation6 [shape = 's32[1]{0}', space=sflag, size = 0x4, scoped, tag = 'scoped memory for tpu_custom_call.1']
    #allocation7 [shape = 'u8[32768]{0}', space=vmem, size = 0x8000, scoped, tag = 'input window, operand 2, single buffered']
    #allocation8 [shape = 'u8[32768]{0}', space=vmem, size = 0x8000, scoped, tag = 'input window, operand 3, single buffered']
    #allocation9 [shape = 's32[1]{0}', space=sflag, size = 0x4, scoped, tag = 'scoped memory for tpu_custom_call.1']
    #allocation10 [shape = 'u8[32768]{0}', space=vmem, size = 0x8000, scoped, tag = 'output window, operand 0, single buffered']
    #allocation11 [shape = 'u8[32768]{0}', space=vmem, size = 0x8000, scoped, tag = 'output window, operand 1, single buffered']
    #allocation12 [shape = 's32[1]{0}', space=sflag, size = 0x4, scoped, tag = 'scoped memory for tpu_custom_call.1']
    %11 = vsyncpa [#allocation3], 0
    %12 = vsyncpa [#allocation6], 0
    %13 = vsyncpa [#allocation9], 0
    %14 = vsyncpa [#allocation4], 0
    %15 = vsyncpa [#allocation12], 0
    // Predicated region
    $region2: #{tpu_custom_call.1} parent=1 // pred_check
      _
    $region3: #{tpu_custom_call.1} parent=1 // pred_check_branch
      %17 = sbr.rel (0) target = $region5
    $region4: #{tpu_custom_call.1} parent=1 // pred_region
      %s19 = ssub.s32 128, 128
      %20 = vsyncadd [#allocation3], %s19
      %s22 = sshll.u32 [#allocation2], 4
      %s23 = int_to_ptr.vmem [resolvable:$true] %s22
      %25 = dma.hbm_to_vmem [thread:$0]  %s0, 128, %s23, [#allocation3]
    $region5: #{tpu_custom_call.1} parent=1 // pred_fallthru
      _
    // Predicated region
    $region6: #{tpu_custom_call.1} parent=1 // pred_check
      _
    $region7: #{tpu_custom_call.1} parent=1 // pred_check_branch
      %27 = sbr.rel (0) target = $region9
    $region8: #{tpu_custom_call.1} parent=1 // pred_region
      %s29 = ssub.s32 128, 128
      %30 = vsyncadd [#allocation6], %s29
      %s32 = sshll.u32 [#allocation5], 4
      %s33 = int_to_ptr.vmem [resolvable:$true] %s32
      %35 = dma.hbm_to_vmem [thread:$0]  %s1, 128, %s33, [#allocation6]
    $region9: #{tpu_custom_call.1} parent=1 // pred_fallthru
      _
    // Predicated region
    $region10: #{tpu_custom_call.1} parent=1 // pred_check
      _
    $region11: #{tpu_custom_call.1} parent=1 // pred_check_branch
      %37 = sbr.rel (0) target = $region13
    $region12: #{tpu_custom_call.1} parent=1 // pred_region
      %s39 = ssub.s32 1024, 1024
      %40 = vsyncadd [#allocation6], %s39
      %s41 = sshll.u32 [#allocation7], 4
      %s42 = int_to_ptr.vmem [resolvable:$true] %s41
      %47 = dma.hbm_to_vmem [thread:$0]  %s2, 1024, %s42, [#allocation6], 128, 128, 8
    $region13: #{tpu_custom_call.1} parent=1 // pred_fallthru
      _
    // Predicated region
    $region14: #{tpu_custom_call.1} parent=1 // pred_check
      _
    $region15: #{tpu_custom_call.1} parent=1 // pred_check_branch
      %49 = sbr.rel (0) target = $region17
    $region16: #{tpu_custom_call.1} parent=1 // pred_region
      %s51 = ssub.s32 1024, 1024
      %52 = vsyncadd [#allocation9], %s51
      %s53 = sshll.u32 [#allocation8], 4
      %s54 = int_to_ptr.vmem [resolvable:$true] %s53
      %59 = dma.hbm_to_vmem [thread:$0]  %s3, 1024, %s54, [#allocation9], 128, 128, 8
    $region17: #{tpu_custom_call.1} parent=1 // pred_fallthru
      _
    // Predicated region
    $region18: #{tpu_custom_call.1} parent=1 // pred_check
      _
    $region19: #{tpu_custom_call.1} parent=1 // pred_check_branch
      %61 = sbr.rel (0) target = $region21
    $region20: #{tpu_custom_call.1} parent=1 // pred_region
      %62 = dma.done [#allocation3], 128
    $region21: #{tpu_custom_call.1} parent=1 // pred_fallthru
      _
    // Predicated region
    $region22: #{tpu_custom_call.1} parent=1 // pred_check
      _
    $region23: #{tpu_custom_call.1} parent=1 // pred_check_branch
      %64 = sbr.rel (0) target = $region25
    $region24: #{tpu_custom_call.1} parent=1 // pred_region
      %65 = dma.done [#allocation6], 128
    $region25: #{tpu_custom_call.1} parent=1 // pred_fallthru
      _
    // Predicated region
    $region26: #{tpu_custom_call.1} parent=1 // pred_check
      _
    $region27: #{tpu_custom_call.1} parent=1 // pred_check_branch
      %67 = sbr.rel (0) target = $region29
    $region28: #{tpu_custom_call.1} parent=1 // pred_region
      %68 = dma.done [#allocation6], 1024
    $region29: #{tpu_custom_call.1} parent=1 // pred_fallthru
      _
    // Predicated region
    $region30: #{tpu_custom_call.1} parent=1 // pred_check
      _
    $region31: #{tpu_custom_call.1} parent=1 // pred_check_branch
      %70 = sbr.rel (0) target = $region33
    $region32: #{tpu_custom_call.1} parent=1 // pred_region
      %71 = dma.done [#allocation9], 1024
    $region33: #{tpu_custom_call.1} parent=1 // pred_fallthru
      _
    %v72 = vld [vmem:[#allocation2] sm:$0xff]
    %v73 = vld [vmem:[#allocation5] sm:$0xff]
    %v74 = vld [vmem:[#allocation7] sm:$0xff]
    %v75 = vld [vmem:[#allocation7 + $0x8] sm:$0xff]
    %v76 = vld [vmem:[#allocation7 + $0x10] sm:$0xff]
    %v77 = vld [vmem:[#allocation7 + $0x18] sm:$0xff]
    %v78 = vld [vmem:[#allocation7 + $0x20] sm:$0xff]
    %v79 = vld [vmem:[#allocation7 + $0x28] sm:$0xff]
    %v80 = vld [vmem:[#allocation7 + $0x30] sm:$0xff]
    %v81 = vld [vmem:[#allocation7 + $0x38] sm:$0xff]
    %v82 = vld [vmem:[#allocation8] sm:$0xff]
    %v83 = vld [vmem:[#allocation8 + $0x8] sm:$0xff]
    %v84 = vld [vmem:[#allocation8 + $0x10] sm:$0xff]
    %v85 = vld [vmem:[#allocation8 + $0x18] sm:$0xff]
    %v86 = vld [vmem:[#allocation8 + $0x20] sm:$0xff]
    %v87 = vld [vmem:[#allocation8 + $0x28] sm:$0xff]
    %v88 = vld [vmem:[#allocation8 + $0x30] sm:$0xff]
    %v89 = vld [vmem:[#allocation8 + $0x38] sm:$0xff]
    %v90 = vmul.f32 %v74, %v72
    %v91 = vmul.f32 %v75, %v72
    %v92 = vmul.f32 %v76, %v72
    %v93 = vmul.f32 %v77, %v72
    %v94 = vmul.f32 %v78, %v72
    %v95 = vmul.f32 %v79, %v72
    %v96 = vmul.f32 %v80, %v72
    %v97 = vmul.f32 %v81, %v72
    %98 = vrot.lane.b32.xlu0 %v74, 64
    %v99 = vpop.permute.xlu0 %98
    %100 = vrot.lane.b32.xlu0 %v75, 64
    %v101 = vpop.permute.xlu0 %100
    %102 = vrot.lane.b32.xlu0 %v76, 64
    %v103 = vpop.permute.xlu0 %102
    %104 = vrot.lane.b32.xlu0 %v77, 64
    %v105 = vpop.permute.xlu0 %104
    %106 = vrot.lane.b32.xlu0 %v78, 64
    %v107 = vpop.permute.xlu0 %106
    %108 = vrot.lane.b32.xlu0 %v79, 64
    %v109 = vpop.permute.xlu0 %108
    %110 = vrot.lane.b32.xlu0 %v80, 64
    %v111 = vpop.permute.xlu0 %110
    %112 = vrot.lane.b32.xlu0 %v81, 64
    %v113 = vpop.permute.xlu0 %112
    %v114 = vmul.f32 %v99, %v73
    %v115 = vmul.f32 %v101, %v73
    %v116 = vmul.f32 %v103, %v73
    %v117 = vmul.f32 %v105, %v73
    %v118 = vmul.f32 %v107, %v73
    %v119 = vmul.f32 %v109, %v73
    %v120 = vmul.f32 %v111, %v73
    %v121 = vmul.f32 %v113, %v73
    %v122 = vadd.f32 %v90, %v114
    %v123 = vadd.f32 %v91, %v115
    %v124 = vadd.f32 %v92, %v116
    %v125 = vadd.f32 %v93, %v117
    %v126 = vadd.f32 %v94, %v118
    %v127 = vadd.f32 %v95, %v119
    %v128 = vadd.f32 %v96, %v120
    %v129 = vadd.f32 %v97, %v121
    %130 = vst [vmem:[#allocation10] sm:$0xff] %v122
    %131 = vst [vmem:[#allocation10 + $0x8] sm:$0xff] %v123
    %132 = vst [vmem:[#allocation10 + $0x10] sm:$0xff] %v124
    %133 = vst [vmem:[#allocation10 + $0x18] sm:$0xff] %v125
    %134 = vst [vmem:[#allocation10 + $0x20] sm:$0xff] %v126
    %135 = vst [vmem:[#allocation10 + $0x28] sm:$0xff] %v127
    %136 = vst [vmem:[#allocation10 + $0x30] sm:$0xff] %v128
    %137 = vst [vmem:[#allocation10 + $0x38] sm:$0xff] %v129
    %v138 = vmul.f32 %v82, %v72
    %v139 = vmul.f32 %v83, %v72
    %v140 = vmul.f32 %v84, %v72
    %v141 = vmul.f32 %v85, %v72
    %v142 = vmul.f32 %v86, %v72
    %v143 = vmul.f32 %v87, %v72
    %v144 = vmul.f32 %v88, %v72
    %v145 = vmul.f32 %v89, %v72
    %146 = vrot.lane.b32.xlu0 %v82, 64
    %v147 = vpop.permute.xlu0 %146
    %148 = vrot.lane.b32.xlu0 %v83, 64
    %v149 = vpop.permute.xlu0 %148
    %150 = vrot.lane.b32.xlu0 %v84, 64
    %v151 = vpop.permute.xlu0 %150
    %152 = vrot.lane.b32.xlu0 %v85, 64
    %v153 = vpop.permute.xlu0 %152
    %154 = vrot.lane.b32.xlu0 %v86, 64
    %v155 = vpop.permute.xlu0 %154
    %156 = vrot.lane.b32.xlu0 %v87, 64
    %v157 = vpop.permute.xlu0 %156
    %158 = vrot.lane.b32.xlu0 %v88, 64
    %v159 = vpop.permute.xlu0 %158
    %160 = vrot.lane.b32.xlu0 %v89, 64
    %v161 = vpop.permute.xlu0 %160
    %v162 = vmul.f32 %v147, %v73
    %v163 = vmul.f32 %v149, %v73
    %v164 = vmul.f32 %v151, %v73
    %v165 = vmul.f32 %v153, %v73
    %v166 = vmul.f32 %v155, %v73
    %v167 = vmul.f32 %v157, %v73
    %v168 = vmul.f32 %v159, %v73
    %v169 = vmul.f32 %v161, %v73
    %v170 = vadd.f32 %v138, %v162
    %v171 = vadd.f32 %v139, %v163
    %v172 = vadd.f32 %v140, %v164
    %v173 = vadd.f32 %v141, %v165
    %v174 = vadd.f32 %v142, %v166
    %v175 = vadd.f32 %v143, %v167
    %v176 = vadd.f32 %v144, %v168
    %v177 = vadd.f32 %v145, %v169
    %178 = vst [vmem:[#allocation11] sm:$0xff] %v170
    %179 = vst [vmem:[#allocation11 + $0x8] sm:$0xff] %v171
    %180 = vst [vmem:[#allocation11 + $0x10] sm:$0xff] %v172
    %181 = vst [vmem:[#allocation11 + $0x18] sm:$0xff] %v173
    %182 = vst [vmem:[#allocation11 + $0x20] sm:$0xff] %v174
    %183 = vst [vmem:[#allocation11 + $0x28] sm:$0xff] %v175
    %184 = vst [vmem:[#allocation11 + $0x30] sm:$0xff] %v176
    %185 = vst [vmem:[#allocation11 + $0x38] sm:$0xff] %v177
    // Predicated region
    $region34: #{tpu_custom_call.1} parent=1 // pred_check
      _
    $region35: #{tpu_custom_call.1} parent=1 // pred_check_branch
      %187 = sbr.rel (0) target = $region37
    $region36: #{tpu_custom_call.1} parent=1 // pred_region
      %s189 = ssub.s32 1024, 1024
      %190 = vsyncadd [#allocation4], %s189
      %s191 = sshll.u32 [#allocation10], 4
      %s192 = int_to_ptr.vmem [resolvable:$true] %s191
      %197 = dma.vmem_to_hbm [thread:$0]  %s192, 1024, %s4, [#allocation4], 128, 128, 8
    $region37: #{tpu_custom_call.1} parent=1 // pred_fallthru
      _
    // Predicated region
    $region38: #{tpu_custom_call.1} parent=1 // pred_check
      _
    $region39: #{tpu_custom_call.1} parent=1 // pred_check_branch
      %199 = sbr.rel (0) target = $region41
    $region40: #{tpu_custom_call.1} parent=1 // pred_region
      %s201 = ssub.s32 1024, 1024
      %202 = vsyncadd [#allocation12], %s201
      %s203 = sshll.u32 [#allocation11], 4
      %s204 = int_to_ptr.vmem [resolvable:$true] %s203
      %209 = dma.vmem_to_hbm [thread:$0]  %s204, 1024, %s5, [#allocation12], 128, 128, 8
    $region41: #{tpu_custom_call.1} parent=1 // pred_fallthru
      _
    // Predicated region
    $region42: #{tpu_custom_call.1} parent=1 // pred_check
      _
    $region43: #{tpu_custom_call.1} parent=1 // pred_check_branch
      %211 = sbr.rel (0) target = $region45
    $region44: #{tpu_custom_call.1} parent=1 // pred_region
      %212 = dma.done [#allocation4], 1024
    $region45: #{tpu_custom_call.1} parent=1 // pred_fallthru
      _
    // Predicated region
    $region46: #{tpu_custom_call.1} parent=1 // pred_check
      _
    $region47: #{tpu_custom_call.1} parent=1 // pred_check_branch
      %214 = sbr.rel (0) target = $region49
    $region48: #{tpu_custom_call.1} parent=1 // pred_region
      %215 = dma.done [#allocation12], 1024
    $region49: #{tpu_custom_call.1} parent=1 // pred_fallthru
      _
    %216 = vsyncpa [#allocation3], 1
    %217 = vsyncpa [#allocation6], 1
    %218 = vsyncpa [#allocation9], 1
    %219 = vsyncpa [#allocation4], 1
    %220 = vsyncpa [#allocation12], 1

</llo_original>
